<compile_context>
chip_gen: v5e
topology: v5e:2x2
jax: 0.10.0
libtpu: 0.0.40
codegen_flags: <defaults>
</compile_context>

<pallas_src>
import functools

import jax
import jax.numpy as jnp
from jax.experimental import pallas as pl
from jax.experimental.pallas import tpu as pltpu

EPSILON = 1e-07


def _cdiv(a, b):
    return (a + b - 1) // b


def _round_up(x, m):
    return ((x + m - 1) // m) * m


def _sublane_tile(dtype):
    # Sublane packing tile: f32 -> 8, bf16/f16 -> 16, int8/fp8 -> 32.
    return max(8, 32 // jnp.dtype(dtype).itemsize)


def _tpu_vmem_capacity_bytes():
    try:
        return int(pltpu.get_tpu_info().vmem_capacity_bytes)
    except Exception:
        return 64 * 1024 * 1024  # conservative fallback: v7x per-TC VMEM


def _choose_spatial_tile(hw, bytes_per_lane, budget, max_tile=None):
    """Largest spatial tile T (multiple of 128, <= hw) such that the
    double-buffered input working set (bytes_per_lane * T) fits `budget`."""
    cap = budget // max(bytes_per_lane, 1)
    if max_tile is not None:
        cap = min(cap, int(max_tile))
    if hw <= 128:
        return hw                    # single full-extent block (exact)
    t = min(cap, hw)
    t = (t // 128) * 128
    return max(t, 128)               # floor of 128 even for pathological C


def _iou_partial_kernel(real_ref, gen_ref, inter_ref, rsum_ref, gsum_ref, *,
                        hw, tile, steps_per_split, needs_mask):
    # real_ref, gen_ref      : (1, C, T) native dtype in VMEM
    # inter/rsum/gsum refs   : (1, C, 1) float32, resident across the HW axis
    p = pl.program_id(1)
    s = pl.program_id(2)

    @pl.when(s == 0)
    def _init():
        inter_ref[...] = jnp.zeros_like(inter_ref)
        rsum_ref[...] = jnp.zeros_like(rsum_ref)
        gsum_ref[...] = jnp.zeros_like(gsum_ref)

    # Single cast point: HBM traffic stays in the native dtype, compute in f32.
    real = real_ref[...].astype(jnp.float32)   # (1, C, T)
    gen = gen_ref[...].astype(jnp.float32)     # (1, C, T)

    if needs_mask:
        # Zero out lanes past the true spatial extent (padded tail tile, or
        # fully-padded overflow tiles from the P-way split).  Masking `gen`
        # first keeps exp() finite; masking `real` and `g` zeroes every
        # contribution from padded lanes.
        start = (p * steps_per_split + s) * tile
        lane = jax.lax.broadcasted_iota(jnp.int32, (1, 1, tile), 2)
        mask = (start + lane) < hw             # (1, 1, T)
        real = jnp.where(mask, real, 0.0)
        gen = jnp.where(mask, gen, 0.0)

    # Numerically stable per-pixel softmax over the channel (sublane) axis.
    m = jnp.max(gen, axis=1, keepdims=True)          # (1, 1, T)
    e = jnp.exp(gen - m)                             # (1, C, T)
    denom = jnp.sum(e, axis=1, keepdims=True)        # (1, 1, T)

    # One EUP reciprocal per pixel + 2 Newton steps (VPU) ~= exact f32 divide,
    # C x cheaper than a full-tensor divide and hidden under the HBM DMA.
    inv = pl.reciprocal(denom, approx=True)
    inv = inv * (2.0 - denom * inv)
    inv = inv * (2.0 - denom * inv)
    g = e * inv                                      # (1, C, T)
    if needs_mask:
        g = jnp.where(mask, g, 0.0)

    # Lane-axis reductions, accumulated across spatial tiles in f32.
    inter_ref[...] += jnp.sum(real * g, axis=2, keepdims=True)  # (1, C, 1)
    rsum_ref[...] += jnp.sum(real, axis=2, keepdims=True)
    gsum_ref[...] += jnp.sum(g, axis=2, keepdims=True)


def iou_pallas(real_result, generated_result, *, spatial_splits=None,
               max_spatial_tile=None):
    """real_result, generated_result: [B, C, H, W] -> IoU per (batch, class) [B, C].

    For best wall-clock on any generation, stream bf16 inputs (halves HBM bytes);
    all in-kernel math is f32 regardless of input dtype.
    """
    B, C, H, W = real_result.shape
    assert generated_result.shape == (B, C, H, W)
    HW = H * W

    # Keep native dtypes: no pre-kernel upcast (the op is HBM-bandwidth-bound).
    real3 = real_result.reshape(B, C, HW)
    gen3 = generated_result.reshape(B, C, HW)

    # --- Generation-aware VMEM budget, sublane-padding aware ------------------
    vmem_total = _tpu_vmem_capacity_bytes()
    input_budget = min(24 * 1024 * 1024, vmem_total // 3)
    # Per spatial lane: 2 pipeline buffers x (padded-C rows of each input).
    bytes_per_lane = 2 * (
        _round_up(C, _sublane_tile(real3.dtype)) * jnp.dtype(real3.dtype).itemsize
        + _round_up(C, _sublane_tile(gen3.dtype)) * jnp.dtype(gen3.dtype).itemsize)
    T = _choose_spatial_tile(HW, bytes_per_lane, input_budget,
                             max_tile=max_spatial_tile)
    num_blocks = _cdiv(HW, T)

    # --- P-way spatial split across TensorCores (useful for B == 1 on v7x) ----
    if spatial_splits is None:
        P = 2 if (B == 1 and num_blocks >= 2) else 1
    else:
        P = max(int(spatial_splits), 1)
    steps_per_split = _cdiv(num_blocks, P)
    needs_mask = (P * steps_per_split * T) != HW

    kernel = functools.partial(
        _iou_partial_kernel, hw=HW, tile=T,
        steps_per_split=steps_per_split, needs_mask=needs_mask)

    def in_index_map(b, p, s):
        l = p * steps_per_split + s
        # Clamp so the DMA never indexes past the last physical block; tiles
        # whose logical index overflows are fully masked in the kernel.
        return (b, 0, jnp.minimum(l, num_blocks - 1))

    def out_index_map(b, p, s):
        return (b * P + p, 0, 0)

    vmem_limit = int(min(vmem_total * 3 // 4, 2 * input_budget + (8 << 20)))

    out_sds = jax.ShapeDtypeStruct((B * P, C, 1), jnp.float32)
    inter_p, rsum_p, gsum_p = pl.pallas_call(
        kernel,
        out_shape=(out_sds, out_sds, out_sds),
        grid_spec=pltpu.PrefetchScalarGridSpec(
            num_scalar_prefetch=0,
            grid=(B, P, steps_per_split),
            in_specs=[
                pl.BlockSpec((1, C, T), in_index_map),
                pl.BlockSpec((1, C, T), in_index_map),
            ],
            # Output blocks resident across the spatial (reduction) axis;
            # they double as the accumulators.
            out_specs=[
                pl.BlockSpec((1, C, 1), out_index_map),
                pl.BlockSpec((1, C, 1), out_index_map),
                pl.BlockSpec((1, C, 1), out_index_map),
            ],
        ),
        compiler_params=pltpu.CompilerParams(
            dimension_semantics=("parallel", "parallel", "arbitrary"),
            vmem_limit_bytes=vmem_limit,
        ),
    )(real3, gen3)

    # Tiny combine over the spatial splits + final division (exact f32 math,
    # identical formula to the reference).
    inter = inter_p.reshape(B, P, C).sum(axis=1)
    rsum = rsum_p.reshape(B, P, C).sum(axis=1)
    gsum = gsum_p.reshape(B, P, C).sum(axis=1)
    return inter / (rsum + gsum - inter + EPSILON)


def iou_reference(real_result, generated_result):
    g = jax.nn.softmax(generated_result.astype(jnp.float32), axis=1)
    r = real_result.astype(jnp.float32)
    inter = jnp.sum(r * g, axis=(2, 3))
    union = jnp.sum(r, axis=(2, 3)) + jnp.sum(g, axis=(2, 3)) - inter
    return inter / (union + EPSILON)


if __name__ == "__main__":
    key = jax.random.PRNGKey(0)
    k1, k2, k3, k4 = jax.random.split(key, 4)

    B, C, H, W = 2, 4, 16, 16
    # "real" one-hot target over channels, "generated" raw logits.
    labels = jax.random.randint(k1, (B, H, W), 0, C)
    real = jax.nn.one_hot(labels, C, axis=1).astype(jnp.float32)        # [B, C, H, W]
    generated = jax.random.normal(k2, (B, C, H, W), dtype=jnp.float32)  # [B, C, H, W]
    ref = iou_reference(real, generated)

    # Default tiling (single spatial tile at this small size).
    out = jax.block_until_ready(iou_pallas(real, generated))
    assert out.shape == (B, C)
    assert jnp.allclose(out, ref, atol=1e-5, rtol=1e-5), (out, ref)

    # Multi-step spatial grid: exercises init/accumulate across tiles.
    out_tiled = jax.block_until_ready(iou_pallas(real, generated, max_spatial_tile=128))
    assert jnp.allclose(out_tiled, ref, atol=1e-5, rtol=1e-5), (out_tiled, ref)

    # Explicit 2-way spatial split (v7x two-TensorCore path) + partial combine.
    out_split = jax.block_until_ready(
        iou_pallas(real, generated, spatial_splits=2, max_spatial_tile=128))
    assert jnp.allclose(out_split, ref, atol=1e-5, rtol=1e-5), (out_split, ref)

    # Batch-1 default path: auto spatial split across TCs when >1 tile.
    out_b1 = jax.block_until_ready(
        iou_pallas(real[:1], generated[:1], max_spatial_tile=128))
    ref_b1 = iou_reference(real[:1], generated[:1])
    assert jnp.allclose(out_b1, ref_b1, atol=1e-5, rtol=1e-5), (out_b1, ref_b1)

    # Non-128-multiple spatial size: exercises the padded + masked tail tile.
    Ho, Wo = 13, 11
    labels_o = jax.random.randint(k3, (B, Ho, Wo), 0, C)
    real_o = jax.nn.one_hot(labels_o, C, axis=1).astype(jnp.float32)
    gen_o = jax.random.normal(k4, (B, C, Ho, Wo), dtype=jnp.float32)
    ref_o = iou_reference(real_o, gen_o)
    out_o = jax.block_until_ready(iou_pallas(real_o, gen_o))
    assert jnp.allclose(out_o, ref_o, atol=1e-5, rtol=1e-5), (out_o, ref_o)
    out_o2 = jax.block_until_ready(iou_pallas(real_o, gen_o, spatial_splits=2))
    assert jnp.allclose(out_o2, ref_o, atol=1e-5, rtol=1e-5), (out_o2, ref_o)

    # Native-dtype path: bf16 inputs stream through uncast (half the HBM bytes).
    real_bf16 = real.astype(jnp.bfloat16)
    gen_bf16 = generated.astype(jnp.bfloat16)
    ref_bf16 = iou_reference(real_bf16, gen_bf16)
    out_bf16 = jax.block_until_ready(iou_pallas(real_bf16, gen_bf16))
    assert jnp.allclose(out_bf16, ref_bf16, atol=1e-4, rtol=1e-4), (out_bf16, ref_bf16)

    print("KERNEL_OK")
</pallas_src>

<mosaic_0001>
module attributes {stable_mosaic.version = 11 : i64} {
  func.func @_iou_partial_kernel(%arg0: i32, %arg1: i32, %arg2: i32, %arg3: memref<1x4x256xf32, #tpu.memory_space<vmem>>, %arg4: memref<1x4x256xf32, #tpu.memory_space<vmem>>, %arg5: memref<1x4x1xf32, #tpu.memory_space<vmem>>, %arg6: memref<1x4x1xf32, #tpu.memory_space<vmem>>, %arg7: memref<1x4x1xf32, #tpu.memory_space<vmem>>) attributes {dimension_semantics = [#tpu.dimension_semantics<parallel>, #tpu.dimension_semantics<parallel>, #tpu.dimension_semantics<arbitrary>], iteration_bounds = array<i64: 2, 1, 1>, scalar_prefetch = 0 : i64, scratch_operands = 0 : i64, tpu.core_type = #tpu.core_type<tc>, window_params = [{transform_indices = @transform_0, window_bounds = array<i64: 1, 4, 256>}, {transform_indices = @transform_1, window_bounds = array<i64: 1, 4, 256>}, {transform_indices = @transform_2, window_bounds = array<i64: 1, 4, 1>}, {transform_indices = @transform_3, window_bounds = array<i64: 1, 4, 1>}, {transform_indices = @transform_4, window_bounds = array<i64: 1, 4, 1>}]} {
    %c0_i32 = arith.constant 0 : i32
    %0 = arith.cmpi eq, %arg2, %c0_i32 : i32
    %1 = arith.extui %0 : i1 to i32
    %c0_i32_0 = arith.constant 0 : i32
    %2 = arith.cmpi ne, %1, %c0_i32_0 : i32
    scf.if %2 {
      %cst_30 = arith.constant 0.000000e+00 : f32
      %39 = vector.broadcast %cst_30 : f32 to vector<1x4x1xf32>
      %c0_31 = arith.constant 0 : index
      %c0_32 = arith.constant 0 : index
      %c0_33 = arith.constant 0 : index
      %40 = vector.load %arg5[%c0_31, %c0_32, %c0_33] : memref<1x4x1xf32, #tpu.memory_space<vmem>>, vector<1x4x1xf32>
      tpu.vector_store %arg5[%c0_31, %c0_32, %c0_33], %39 {strides = array<i32>} : memref<1x4x1xf32, #tpu.memory_space<vmem>>, vector<1x4x1xf32>,
      %cst_34 = arith.constant 0.000000e+00 : f32
      %41 = vector.broadcast %cst_34 : f32 to vector<1x4x1xf32>
      %c0_35 = arith.constant 0 : index
      %c0_36 = arith.constant 0 : index
      %c0_37 = arith.constant 0 : index
      %42 = vector.load %arg6[%c0_35, %c0_36, %c0_37] : memref<1x4x1xf32, #tpu.memory_space<vmem>>, vector<1x4x1xf32>
      tpu.vector_store %arg6[%c0_35, %c0_36, %c0_37], %41 {strides = array<i32>} : memref<1x4x1xf32, #tpu.memory_space<vmem>>, vector<1x4x1xf32>,
      %cst_38 = arith.constant 0.000000e+00 : f32
      %43 = vector.broadcast %cst_38 : f32 to vector<1x4x1xf32>
      %c0_39 = arith.constant 0 : index
      %c0_40 = arith.constant 0 : index
      %c0_41 = arith.constant 0 : index
      %44 = vector.load %arg7[%c0_39, %c0_40, %c0_41] : memref<1x4x1xf32, #tpu.memory_space<vmem>>, vector<1x4x1xf32>
      tpu.vector_store %arg7[%c0_39, %c0_40, %c0_41], %43 {strides = array<i32>} : memref<1x4x1xf32, #tpu.memory_space<vmem>>, vector<1x4x1xf32>,
    } else {
    }
    %c0 = arith.constant 0 : index
    %c0_1 = arith.constant 0 : index
    %c0_2 = arith.constant 0 : index
    %3 = vector.load %arg3[%c0, %c0_1, %c0_2] : memref<1x4x256xf32, #tpu.memory_space<vmem>>, vector<1x4x256xf32>
    %c0_3 = arith.constant 0 : index
    %c0_4 = arith.constant 0 : index
    %c0_5 = arith.constant 0 : index
    %4 = vector.load %arg4[%c0_3, %c0_4, %c0_5] : memref<1x4x256xf32, #tpu.memory_space<vmem>>, vector<1x4x256xf32>
    %cst = arith.constant dense<0xFF800000> : vector<1x256xf32>
    %5 = vector.multi_reduction <maximumf>, %4, %cst [1] : vector<1x4x256xf32> to vector<1x256xf32>
    %6 = vector.shape_cast %5 : vector<1x256xf32> to vector<1x1x256xf32>
    %7 = vector.broadcast %6 : vector<1x1x256xf32> to vector<1x4x256xf32>
    %8 = arith.subf %4, %7 : vector<1x4x256xf32>
    %9 = math.exp %8 : vector<1x4x256xf32>
    %cst_6 = arith.constant dense<0.000000e+00> : vector<1x256xf32>
    %10 = vector.multi_reduction <add>, %9, %cst_6 [1] : vector<1x4x256xf32> to vector<1x256xf32>
    %11 = vector.shape_cast %10 : vector<1x256xf32> to vector<1x1x256xf32>
    %12 = tpu.reciprocal %11 {approx = true} : vector<1x1x256xf32> -> vector<1x1x256xf32>
    %13 = arith.mulf %11, %12 : vector<1x1x256xf32>
    %cst_7 = arith.constant 2.000000e+00 : f32
    %14 = vector.broadcast %cst_7 : f32 to vector<1x1x256xf32>
    %15 = arith.subf %14, %13 : vector<1x1x256xf32>
    %16 = arith.mulf %12, %15 : vector<1x1x256xf32>
    %17 = arith.mulf %11, %16 : vector<1x1x256xf32>
    %cst_8 = arith.constant 2.000000e+00 : f32
    %18 = vector.broadcast %cst_8 : f32 to vector<1x1x256xf32>
    %19 = arith.subf %18, %17 : vector<1x1x256xf32>
    %20 = arith.mulf %16, %19 : vector<1x1x256xf32>
    %21 = vector.broadcast %20 : vector<1x1x256xf32> to vector<1x4x256xf32>
    %22 = arith.mulf %9, %21 : vector<1x4x256xf32>
    %c0_9 = arith.constant 0 : index
    %c0_10 = arith.constant 0 : index
    %c0_11 = arith.constant 0 : index
    %23 = vector.load %arg5[%c0_9, %c0_10, %c0_11] : memref<1x4x1xf32, #tpu.memory_space<vmem>>, vector<1x4x1xf32>
    %24 = arith.mulf %3, %22 : vector<1x4x256xf32>
    %cst_12 = arith.constant dense<0.000000e+00> : vector<1x4xf32>
    %25 = vector.multi_reduction <add>, %24, %cst_12 [2] : vector<1x4x256xf32> to vector<1x4xf32>
    %26 = vector.shape_cast %25 : vector<1x4xf32> to vector<1x4x1xf32>
    %27 = arith.addf %23, %26 : vector<1x4x1xf32>
    %c0_13 = arith.constant 0 : index
    %c0_14 = arith.constant 0 : index
    %c0_15 = arith.constant 0 : index
    %28 = vector.load %arg5[%c0_13, %c0_14, %c0_15] : memref<1x4x1xf32, #tpu.memory_space<vmem>>, vector<1x4x1xf32>
    tpu.vector_store %arg5[%c0_13, %c0_14, %c0_15], %27 {strides = array<i32>} : memref<1x4x1xf32, #tpu.memory_space<vmem>>, vector<1x4x1xf32>,
    %c0_16 = arith.constant 0 : index
    %c0_17 = arith.constant 0 : index
    %c0_18 = arith.constant 0 : index
    %29 = vector.load %arg6[%c0_16, %c0_17, %c0_18] : memref<1x4x1xf32, #tpu.memory_space<vmem>>, vector<1x4x1xf32>
    %cst_19 = arith.constant dense<0.000000e+00> : vector<1x4xf32>
    %30 = vector.multi_reduction <add>, %3, %cst_19 [2] : vector<1x4x256xf32> to vector<1x4xf32>
    %31 = vector.shape_cast %30 : vector<1x4xf32> to vector<1x4x1xf32>
    %32 = arith.addf %29, %31 : vector<1x4x1xf32>
    %c0_20 = arith.constant 0 : index
    %c0_21 = arith.constant 0 : index
    %c0_22 = arith.constant 0 : index
    %33 = vector.load %arg6[%c0_20, %c0_21, %c0_22] : memref<1x4x1xf32, #tpu.memory_space<vmem>>, vector<1x4x1xf32>
    tpu.vector_store %arg6[%c0_20, %c0_21, %c0_22], %32 {strides = array<i32>} : memref<1x4x1xf32, #tpu.memory_space<vmem>>, vector<1x4x1xf32>,
    %c0_23 = arith.constant 0 : index
    %c0_24 = arith.constant 0 : index
    %c0_25 = arith.constant 0 : index
    %34 = vector.load %arg7[%c0_23, %c0_24, %c0_25] : memref<1x4x1xf32, #tpu.memory_space<vmem>>, vector<1x4x1xf32>
    %cst_26 = arith.constant dense<0.000000e+00> : vector<1x4xf32>
    %35 = vector.multi_reduction <add>, %22, %cst_26 [2] : vector<1x4x256xf32> to vector<1x4xf32>
    %36 = vector.shape_cast %35 : vector<1x4xf32> to vector<1x4x1xf32>
    %37 = arith.addf %34, %36 : vector<1x4x1xf32>
    %c0_27 = arith.constant 0 : index
    %c0_28 = arith.constant 0 : index
    %c0_29 = arith.constant 0 : index
    %38 = vector.load %arg7[%c0_27, %c0_28, %c0_29] : memref<1x4x1xf32, #tpu.memory_space<vmem>>, vector<1x4x1xf32>
    tpu.vector_store %arg7[%c0_27, %c0_28, %c0_29], %37 {strides = array<i32>} : memref<1x4x1xf32, #tpu.memory_space<vmem>>, vector<1x4x1xf32>,
    return
  }
  func.func @transform_0(%arg0: i32, %arg1: i32, %arg2: i32) -> (i32, i32, i32) {
    %c1_i32 = arith.constant 1 : i32
    %0 = arith.muli %arg1, %c1_i32 : i32
    %1 = arith.addi %0, %arg2 : i32
    %c0_i32 = arith.constant 0 : i32
    %2 = arith.minsi %1, %c0_i32 : i32
    %c0_i32_0 = arith.constant 0 : i32
    %c0_i32_1 = arith.constant 0 : i32
    return %arg0, %c0_i32_0, %2 : i32, i32, i32
  }
  func.func @transform_1(%arg0: i32, %arg1: i32, %arg2: i32) -> (i32, i32, i32) {
    %c1_i32 = arith.constant 1 : i32
    %0 = arith.muli %arg1, %c1_i32 : i32
    %1 = arith.addi %0, %arg2 : i32
    %c0_i32 = arith.constant 0 : i32
    %2 = arith.minsi %1, %c0_i32 : i32
    %c0_i32_0 = arith.constant 0 : i32
    %c0_i32_1 = arith.constant 0 : i32
    return %arg0, %c0_i32_0, %2 : i32, i32, i32
  }
  func.func @transform_2(%arg0: i32, %arg1: i32, %arg2: i32) -> (i32, i32, i32) {
    %c1_i32 = arith.constant 1 : i32
    %0 = arith.muli %arg0, %c1_i32 : i32
    %1 = arith.addi %0, %arg1 : i32
    %c0_i32 = arith.constant 0 : i32
    %c0_i32_0 = arith.constant 0 : i32
    %c0_i32_1 = arith.constant 0 : i32
    return %1, %c0_i32, %c0_i32_0 : i32, i32, i32
  }
  func.func @transform_3(%arg0: i32, %arg1: i32, %arg2: i32) -> (i32, i32, i32) {
    %c1_i32 = arith.constant 1 : i32
    %0 = arith.muli %arg0, %c1_i32 : i32
    %1 = arith.addi %0, %arg1 : i32
    %c0_i32 = arith.constant 0 : i32
    %c0_i32_0 = arith.constant 0 : i32
    %c0_i32_1 = arith.constant 0 : i32
    return %1, %c0_i32, %c0_i32_0 : i32, i32, i32
  }
  func.func @transform_4(%arg0: i32, %arg1: i32, %arg2: i32) -> (i32, i32, i32) {
    %c1_i32 = arith.constant 1 : i32
    %0 = arith.muli %arg0, %c1_i32 : i32
    %1 = arith.addi %0, %arg1 : i32
    %c0_i32 = arith.constant 0 : i32
    %c0_i32_0 = arith.constant 0 : i32
    %c0_i32_1 = arith.constant 0 : i32
    return %1, %c0_i32, %c0_i32_0 : i32, i32, i32
  }
}

</mosaic_0001>

<llo_original>
// kernel: tpu_custom_call.1
$region0: #{tpu_custom_call.1}
  #allocation0 [shape = 'u32[]', space=smem, size = 0x4, offset = 0x4, fixed_abs, tag = 'smem constant byte address 0x4 - core index']
  #allocation1 [shape = 'u32[72,128]{1,0:T(1,128)}', space=vmem, size = 0x9000, scoped, tag = 'internal scratch']
  %s0 = inlined_call_operand.hbm [shape: f32[2,4,256], index: 0, kind: input, shape index: {}]
  %s1 = inlined_call_operand.hbm [shape: f32[2,4,256], index: 1, kind: input, shape index: {}]
  %s2 = inlined_call_operand.vmem [shape: f32[2,4,1], index: 2, kind: output, shape index: {0}]
  %s3 = inlined_call_operand.vmem [shape: f32[2,4,1], index: 3, kind: output, shape index: {1}]
  %s4 = inlined_call_operand.vmem [shape: f32[2,4,1], index: 4, kind: output, shape index: {2}]
  %5 = xla_tuple %s2, %s3, %s4
  %s6 = sld [smem:[#allocation0]]
  $region69: #{tpu_custom_call.1} parent=0
    _
  %s8 = ssub.s32 1, %s6
  %s9 = scalar_select 0, %s8, %s6
  $region1: #{tpu_custom_call.1} parent=0
    #allocation2 [shape = 'u8[8192]{0}', space=vmem, size = 0x2000, scoped, tag = 'input window, operand 0']
    #allocation3 [shape = 's32[2]{0}', space=sflag, size = 0x8, scoped, tag = 'scoped memory for tpu_custom_call.1']
    #allocation4 [shape = 'u8[8192]{0}', space=vmem, size = 0x2000, scoped, tag = 'input window, operand 1']
    #allocation5 [shape = 's32[2]{0}', space=sflag, size = 0x8, scoped, tag = 'scoped memory for tpu_custom_call.1']
    %10 = vsyncpa [#allocation3], 0
    %s11 = scalar_lea.sflag [#allocation3], 1
    %12 = vsyncpa %s11, 0
    %13 = vsyncpa [#allocation5], 0
    %s14 = scalar_lea.sflag [#allocation5], 1
    %15 = vsyncpa %s14, 0
    loop: start=0, step=1, limit=4
    $region2: #{tpu_custom_call.1} parent=1 // loop_pre_header
      _
    $region3: #{tpu_custom_call.1} parent=1 // loop_header
      %s17 = sphi 0, %s21
      %p18 = scmp.ge.s32.totalorder %s17, 4
      %s24 = sphi 0, %s43
      %s25 = sphi 0, %s39
      %s26 = sphi 0, %s35
      %s27 = sphi 0, %s24
      %s28 = sphi 0, %s25
      %s29 = sphi 0, %s26
      %s30 = sphi 0, %s27
      %s31 = sphi 0, %s28
      %s32 = sphi 0, %s29
      %s54 = sphi 0, %s56
      %s57 = sphi 0, %s54
      %s58 = sphi 0, %s57
      %s74 = sphi 0, %s58
      %s88 = sphi 0, %s90
      %s91 = sphi 0, %s88
      %s92 = sphi 0, %s91
      %s108 = sphi 0, %s92
      %s116 = sphi 0, %s118
      %s119 = sphi 0, %s116
      %s120 = sphi 0, %s119
      %s136 = sphi 0, %s120
      %s144 = sphi 0, %s146
      %s147 = sphi 0, %s144
      %s148 = sphi 0, %s147
      %s164 = sphi 0, %s148
      %s172 = sphi 0, %s174
      %s175 = sphi 0, %s172
      %s176 = sphi 0, %s175
      %s192 = sphi 0, %s176
    $region4: #{tpu_custom_call.1} parent=1 // loop_header_branch
      %20 = sbr.rel (%p18) target = $region8
    $region5: #{tpu_custom_call.1} parent=1 // loop_body
      %s22 = ssub.s32 %s17, 1
      %s23 = ssub.s32 %s17, 2
      %s33 = sadd.s32 1, %s26
      %p34 = scmp.ge.s32.totalorder %s33, 1
      %s35 = scalar_select %p34, 0, %s33
      %s36 = sadd.s32 1, %s25
      %s37 = scalar_select %p34, %s36, %s25
      %p38 = scmp.ge.s32.totalorder %s37, 1
      %s39 = scalar_select %p38, 0, %s37
      %s40 = sadd.s32 1, %s24
      %s41 = scalar_select %p38, %s40, %s24
      %p42 = scmp.ge.s32.totalorder %s41, 2
      %s43 = scalar_select %p42, 0, %s41
      %s44 = sadd.s32 %s25, %s26
      %p45 = scmp.lt.s32.totalorder %s44, 0
      %s46 = scalar_select %p45, %s44, 0
      %s47 = sadd.s32 %s39, %s35
      %p48 = scmp.lt.s32.totalorder %s47, 0
      %s49 = scalar_select %p48, %s47, 0
      %s50 = ssub.s32 %s24, %s43
      %s51 = ssub.s32 %s46, %s49
      %s52 = sor.u32 %s50, %s51
      %p53 = scmp.eq.s32.totalorder %s52, 0
      %s55 = sadd.s32 %s54, 1
      %s56 = scalar_select %p53, %s54, %s55
      %p59 = pneg %p53
      %p60 = scmp.eq.s32.totalorder %s17, 1
      %p61 = por %p59, %p60
      %p62 = scmp.ne.s32.totalorder %s54, %s57
      %p63 = scmp.eq.s32.totalorder %s17, 0
      %p64 = por %p62, %p63
      %p65 = scmp.ne.s32.totalorder %s54, %s57
      %p66 = scmp.eq.s32.totalorder %s22, 1
      %p67 = por %p65, %p66
      %p68 = scmp.ne.s32.totalorder %s57, %s58
      %p69 = scmp.eq.s32.totalorder %s22, 0
      %p70 = por %p68, %p69
      %p71 = scmp.ne.s32.totalorder %s57, %s58
      %p72 = scmp.eq.s32.totalorder %s23, 1
      %p73 = por %p71, %p72
      %p75 = scmp.ne.s32.totalorder %s58, %s74
      %p76 = scmp.eq.s32.totalorder %s23, 0
      %p77 = por %p75, %p76
      %s78 = sadd.s32 %s25, %s26
      %p79 = scmp.lt.s32.totalorder %s78, 0
      %s80 = scalar_select %p79, %s78, 0
      %s81 = sadd.s32 %s39, %s35
      %p82 = scmp.lt.s32.totalorder %s81, 0
      %s83 = scalar_select %p82, %s81, 0
      %s84 = ssub.s32 %s24, %s43
      %s85 = ssub.s32 %s80, %s83
      %s86 = sor.u32 %s84, %s85
      %p87 = scmp.eq.s32.totalorder %s86, 0
      %s89 = sadd.s32 %s88, 1
      %s90 = scalar_select %p87, %s88, %s89
      %p93 = pneg %p87
      %p94 = scmp.eq.s32.totalorder %s17, 1
      %p95 = por %p93, %p94
      %p96 = scmp.ne.s32.totalorder %s88, %s91
      %p97 = scmp.eq.s32.totalorder %s17, 0
      %p98 = por %p96, %p97
      %p99 = scmp.ne.s32.totalorder %s88, %s91
      %p100 = scmp.eq.s32.totalorder %s22, 1
      %p101 = por %p99, %p100
      %p102 = scmp.ne.s32.totalorder %s91, %s92
      %p103 = scmp.eq.s32.totalorder %s22, 0
      %p104 = por %p102, %p103
      %p105 = scmp.ne.s32.totalorder %s91, %s92
      %p106 = scmp.eq.s32.totalorder %s23, 1
      %p107 = por %p105, %p106
      %p109 = scmp.ne.s32.totalorder %s92, %s108
      %p110 = scmp.eq.s32.totalorder %s23, 0
      %p111 = por %p109, %p110
      %s112 = sadd.s32 %s24, %s25
      %s113 = sadd.s32 %s43, %s39
      %s114 = ssub.s32 %s112, %s113
      %p115 = scmp.eq.s32.totalorder %s114, 0
      %s117 = sadd.s32 %s116, 1
      %s118 = scalar_select %p115, %s116, %s117
      %p121 = pneg %p115
      %p122 = scmp.eq.s32.totalorder %s17, 1
      %p123 = por %p121, %p122
      %p124 = scmp.ne.s32.totalorder %s116, %s119
      %p125 = scmp.eq.s32.totalorder %s17, 0
      %p126 = por %p124, %p125
      %p127 = scmp.ne.s32.totalorder %s116, %s119
      %p128 = scmp.eq.s32.totalorder %s22, 1
      %p129 = por %p127, %p128
      %p130 = scmp.ne.s32.totalorder %s119, %s120
      %p131 = scmp.eq.s32.totalorder %s22, 0
      %p132 = por %p130, %p131
      %p133 = scmp.ne.s32.totalorder %s119, %s120
      %p134 = scmp.eq.s32.totalorder %s23, 1
      %p135 = por %p133, %p134
      %p137 = scmp.ne.s32.totalorder %s120, %s136
      %p138 = scmp.eq.s32.totalorder %s23, 0
      %p139 = por %p137, %p138
      %s140 = sadd.s32 %s24, %s25
      %s141 = sadd.s32 %s43, %s39
      %s142 = ssub.s32 %s140, %s141
      %p143 = scmp.eq.s32.totalorder %s142, 0
      %s145 = sadd.s32 %s144, 1
      %s146 = scalar_select %p143, %s144, %s145
      %p149 = pneg %p143
      %p150 = scmp.eq.s32.totalorder %s17, 1
      %p151 = por %p149, %p150
      %p152 = scmp.ne.s32.totalorder %s144, %s147
      %p153 = scmp.eq.s32.totalorder %s17, 0
      %p154 = por %p152, %p153
      %p155 = scmp.ne.s32.totalorder %s144, %s147
      %p156 = scmp.eq.s32.totalorder %s22, 1
      %p157 = por %p155, %p156
      %p158 = scmp.ne.s32.totalorder %s147, %s148
      %p159 = scmp.eq.s32.totalorder %s22, 0
      %p160 = por %p158, %p159
      %p161 = scmp.ne.s32.totalorder %s147, %s148
      %p162 = scmp.eq.s32.totalorder %s23, 1
      %p163 = por %p161, %p162
      %p165 = scmp.ne.s32.totalorder %s148, %s164
      %p166 = scmp.eq.s32.totalorder %s23, 0
      %p167 = por %p165, %p166
      %s168 = sadd.s32 %s24, %s25
      %s169 = sadd.s32 %s43, %s39
      %s170 = ssub.s32 %s168, %s169
      %p171 = scmp.eq.s32.totalorder %s170, 0
      %s173 = sadd.s32 %s172, 1
      %s174 = scalar_select %p171, %s172, %s173
      %p177 = pneg %p171
      %p178 = scmp.eq.s32.totalorder %s17, 1
      %p179 = por %p177, %p178
      %p180 = scmp.ne.s32.totalorder %s172, %s175
      %p181 = scmp.eq.s32.totalorder %s17, 0
      %p182 = por %p180, %p181
      %p183 = scmp.ne.s32.totalorder %s172, %s175
      %p184 = scmp.eq.s32.totalorder %s22, 1
      %p185 = por %p183, %p184
      %p186 = scmp.ne.s32.totalorder %s175, %s176
      %p187 = scmp.eq.s32.totalorder %s22, 0
      %p188 = por %p186, %p187
      %p189 = scmp.ne.s32.totalorder %s175, %s176
      %p190 = scmp.eq.s32.totalorder %s23, 1
      %p191 = por %p189, %p190
      %p193 = scmp.ne.s32.totalorder %s176, %s192
      %p194 = scmp.eq.s32.totalorder %s23, 0
      %p195 = por %p193, %p194
      %p196 = scmp.le.s32.totalorder 1, %s17
      %p197 = scmp.lt.s32.totalorder %s17, 3
      %p198 = pnand %p196, %p197
      %p199 = pneg %p198
      // Predicated region
      $region9: #{tpu_custom_call.1} parent=5 // pred_check
        _
      $region10: #{tpu_custom_call.1} parent=5 // pred_check_branch
        %201 = sbr.rel (%p198) target = $region12
      $region11: #{tpu_custom_call.1} parent=5 // pred_region
        %s202 = ssub.s32 %s17, 1
      $region12: #{tpu_custom_call.1} parent=5 // pred_fallthru
        _
      %p203 = scmp.lt.s32.totalorder %s17, 2
      // Predicated region
      $region13: #{tpu_custom_call.1} parent=5 // pred_check
        %p204 = pneg %p203
      $region14: #{tpu_custom_call.1} parent=5 // pred_check_branch
        %206 = sbr.rel (%p204) target = $region16
      $region15: #{tpu_custom_call.1} parent=5 // pred_region
        // Predicated region
        $region17: #{tpu_custom_call.1} parent=15 // pred_check
          %p207 = pneg %p64
        $region18: #{tpu_custom_call.1} parent=15 // pred_check_branch
          %209 = sbr.rel (%p207) target = $region20
        $region19: #{tpu_custom_call.1} parent=15 // pred_region
          %s210 = sand.u32 %s54, 1
          %s211 = scalar_lea.sflag [#allocation3], %s210
          %s212 = sand.u32 %s54, 1
          %s213 = smul.addr %s212, 8
          %s214 = scalar_lea.vmem [#allocation2], %s213
          %s215 = sadd.s32 %s25, %s26
          %p216 = scmp.lt.s32.totalorder %s215, 0
          %s217 = scalar_select %p216, %s215, 0
          %s218 = smul.u32 2, %s217
          %220 = vsyncadd %s211, 0
          %s221 = smul.addr %s24, 2
          %s222 = sadd.s32 %s218, %s221
          %s223 = smul.addr %s222, 4
          %s224 = scalar_lea.hbm %s0, %s223
          %s226 = sshll.u32 %s224, 4
          %s227 = int_to_ptr.hbm [resolvable:$true] %s226
          %s228 = sshll.u32 %s214, 4
          %s229 = int_to_ptr.vmem [resolvable:$true] %s228
          %231 = dma.hbm_to_vmem [thread:$0]  %s227, 128, %s229, %s211
        $region20: #{tpu_custom_call.1} parent=15 // pred_fallthru
          _
        // Predicated region
        $region21: #{tpu_custom_call.1} parent=15 // pred_check
          %p232 = pneg %p98
        $region22: #{tpu_custom_call.1} parent=15 // pred_check_branch
          %234 = sbr.rel (%p232) target = $region24
        $region23: #{tpu_custom_call.1} parent=15 // pred_region
          %s235 = sand.u32 %s88, 1
          %s236 = scalar_lea.sflag [#allocation5], %s235
          %s237 = sand.u32 %s88, 1
          %s238 = smul.addr %s237, 8
          %s239 = scalar_lea.vmem [#allocation4], %s238
          %s240 = sadd.s32 %s25, %s26
          %p241 = scmp.lt.s32.totalorder %s240, 0
          %s242 = scalar_select %p241, %s240, 0
          %s243 = smul.u32 2, %s242
          %245 = vsyncadd %s236, 0
          %s246 = smul.addr %s24, 2
          %s247 = sadd.s32 %s243, %s246
          %s248 = smul.addr %s247, 4
          %s249 = scalar_lea.hbm %s1, %s248
          %s251 = sshll.u32 %s249, 4
          %s252 = int_to_ptr.hbm [resolvable:$true] %s251
          %s253 = sshll.u32 %s239, 4
          %s254 = int_to_ptr.vmem [resolvable:$true] %s253
          %256 = dma.hbm_to_vmem [thread:$0]  %s252, 128, %s254, %s236
        $region24: #{tpu_custom_call.1} parent=15 // pred_fallthru
          _
      $region16: #{tpu_custom_call.1} parent=5 // pred_fallthru
        _
      %p257 = scmp.le.s32.totalorder 1, %s17
      %p258 = scmp.lt.s32.totalorder %s17, 3
      %p259 = pnand %p257, %p258
      %p260 = pneg %p259
      // Predicated region
      $region25: #{tpu_custom_call.1} parent=5 // pred_check
        _
      $region26: #{tpu_custom_call.1} parent=5 // pred_check_branch
        %262 = sbr.rel (%p259) target = $region28
      $region27: #{tpu_custom_call.1} parent=5 // pred_region
        %s263 = ssub.s32 %s17, 1
        %s264 = sand.u32 %s57, 1
        %s265 = scalar_lea.sflag [#allocation3], %s264
        %s266 = sand.u32 %s57, 1
        %s267 = smul.addr %s266, 8
        %s268 = scalar_lea.vmem [#allocation2], %s267
        // Predicated region
        $region29: #{tpu_custom_call.1} parent=27 // pred_check
          %p269 = pneg %p70
        $region30: #{tpu_custom_call.1} parent=27 // pred_check_branch
          %271 = sbr.rel (%p269) target = $region32
        $region31: #{tpu_custom_call.1} parent=27 // pred_region
          %273 = dma.done %s265, 128
        $region32: #{tpu_custom_call.1} parent=27 // pred_fallthru
          _
        %s274 = sand.u32 %s91, 1
        %s275 = scalar_lea.sflag [#allocation5], %s274
        %s276 = sand.u32 %s91, 1
        %s277 = smul.addr %s276, 8
        %s278 = scalar_lea.vmem [#allocation4], %s277
        // Predicated region
        $region33: #{tpu_custom_call.1} parent=27 // pred_check
          %p279 = pneg %p104
        $region34: #{tpu_custom_call.1} parent=27 // pred_check_branch
          %281 = sbr.rel (%p279) target = $region36
        $region35: #{tpu_custom_call.1} parent=27 // pred_region
          %283 = dma.done %s275, 128
        $region36: #{tpu_custom_call.1} parent=27 // pred_fallthru
          _
        %s284 = sand.u32 %s57, 1
        %s285 = scalar_lea.sflag [#allocation3], %s284
        %s286 = sand.u32 %s57, 1
        %s287 = smul.addr %s286, 8
        %s288 = scalar_lea.vmem [#allocation2], %s287
        %p289 = pneg %p70
        %p290 = pneg %p67
        %s291 = sand.u32 %s91, 1
        %s292 = scalar_lea.sflag [#allocation5], %s291
        %s293 = sand.u32 %s91, 1
        %s294 = smul.addr %s293, 8
        %s295 = scalar_lea.vmem [#allocation4], %s294
        %p296 = pneg %p104
        %p297 = pneg %p101
        %p298 = pneg %p132
        %p299 = pneg %p129
        %s300 = sadd.s32 %s27, %s28
        %p301 = scmp.lt.s32.totalorder %s300, 1
        %s302 = scalar_select %p301, %s300, 1
        %s303 = smul.addr %s302, 4
        %s304 = scalar_lea.vmem %s2, %s303
        %p305 = pneg %p160
        %p306 = pneg %p157
        %s307 = sadd.s32 %s27, %s28
        %p308 = scmp.lt.s32.totalorder %s307, 1
        %s309 = scalar_select %p308, %s307, 1
        %s310 = smul.addr %s309, 4
        %s311 = scalar_lea.vmem %s3, %s310
        %p312 = pneg %p188
        %p313 = pneg %p185
        %s314 = sadd.s32 %s27, %s28
        %p315 = scmp.lt.s32.totalorder %s314, 1
        %s316 = scalar_select %p315, %s314, 1
        %s317 = smul.addr %s316, 4
        %s318 = scalar_lea.vmem %s4, %s317
        %s319 = sadd.s32 %s28, %s29
        %p320 = scmp.lt.s32.totalorder %s319, 0
        %s321 = scalar_select %p320, %s319, 0
        %s322 = smul.u32 2, %s321
        %s323 = sadd.s32 %s28, %s29
        %p324 = scmp.lt.s32.totalorder %s323, 0
        %s325 = scalar_select %p324, %s323, 0
        %s326 = smul.u32 2, %s325
        %s327 = sadd.s32 %s27, %s28
        %p328 = scmp.lt.s32.totalorder %s327, 1
        %s329 = scalar_select %p328, %s327, 1
        %s330 = smul.addr %s329, 4
        %s331 = scalar_lea.vmem %s2, %s330
        %s332 = sadd.s32 %s27, %s28
        %s333 = sadd.s32 %s27, %s28
        %p334 = scmp.lt.s32.totalorder %s333, 1
        %s335 = scalar_select %p334, %s333, 1
        %s336 = smul.addr %s335, 4
        %s337 = scalar_lea.vmem %s3, %s336
        %s338 = sadd.s32 %s27, %s28
        %s339 = sadd.s32 %s27, %s28
        %p340 = scmp.lt.s32.totalorder %s339, 1
        %s341 = scalar_select %p340, %s339, 1
        %s342 = smul.addr %s341, 4
        %s343 = scalar_lea.vmem %s4, %s342
        %s344 = sadd.s32 %s27, %s28
        %p345 = scmp.eq.s32.totalorder %s29, 0
        // Predicated region
        $region37: #{tpu_custom_call.1} parent=27 // pred_check
          %p346 = pneg %p345
        $region38: #{tpu_custom_call.1} parent=27 // pred_check_branch
          %348 = sbr.rel (%p346) target = $region40
        $region39: #{tpu_custom_call.1} parent=27 // pred_region
          %vm349 = vcmask 3072
          %350 = vst.msk [vmem:[%s331] sm:$0xf] %vm349, 0.0
          %351 = vst.msk [vmem:[%s337] sm:$0xf] %vm349, 0.0
          %352 = vst.msk [vmem:[%s343] sm:$0xf] %vm349, 0.0
        $region40: #{tpu_custom_call.1} parent=27 // pred_fallthru
          _
        %v353 = vld [vmem:[%s268] sm:$0xff]
        %v354 = vld [vmem:[%s278] sm:$0xff]
        %356 = vst [vmem:[#allocation1] ss:$2 sm:$0xff] %v354
        %v357 = vld.sshfl [vmem:[#allocation1] sm:$0xff pattern:$0x75316420]
        %v358 = vld.sshfl [vmem:[#allocation1 + $0x8] sm:$0xff pattern:$0x75316420]
        %vm361 = vcmask 1043456
        %v362 = vsel %vm361, %v357, -inf
        %v363 = vrot.slane %v362, 4
        %v364 = vmax.f32 %v362, %v363
        %v365 = vrot.slane %v364, 2
        %v366 = vmax.f32 %v364, %v365
        %v367 = vrot.slane %v366, 1
        %v368 = vmax.f32 %v366, %v367
        %v369 = vsel %vm361, %v358, -inf
        %v370 = vrot.slane %v369, 4
        %v371 = vmax.f32 %v369, %v370
        %v372 = vrot.slane %v371, 2
        %v373 = vmax.f32 %v371, %v372
        %v374 = vrot.slane %v373, 1
        %v375 = vmax.f32 %v373, %v374
        %v378 = vrot.slane %v375, 4
        %v379 = vsel %vm361, %v368, %v378
        %v381 = vsub.f32 %v354, %v379
        %v382 = vmul.f32 %v381, 1.442695
        %v383 = vpow.pop %v382
        %385 = vst [vmem:[#allocation1] ss:$2 sm:$0xff] %v383
        %v386 = vld.sshfl [vmem:[#allocation1] sm:$0xff pattern:$0x75316420]
        %v387 = vld.sshfl [vmem:[#allocation1 + $0x8] sm:$0xff pattern:$0x75316420]
        %v390 = vsel %vm361, %v386, 0.0
        %v391 = vrot.slane %v390, 4
        %v392 = vadd.f32 %v390, %v391
        %v393 = vrot.slane %v392, 2
        %v394 = vadd.f32 %v392, %v393
        %v395 = vrot.slane %v394, 1
        %v396 = vadd.f32 %v394, %v395
        %v397 = vsel %vm361, %v387, 0.0
        %v398 = vrot.slane %v397, 4
        %v399 = vadd.f32 %v397, %v398
        %v400 = vrot.slane %v399, 2
        %v401 = vadd.f32 %v399, %v400
        %v402 = vrot.slane %v401, 1
        %v403 = vadd.f32 %v401, %v402
        %v404 = vrcp.pop %v396
        %v405 = vrcp.pop %v403
        %v406 = vmul.f32 %v396, %v404
        %v407 = vmul.f32 %v403, %v405
        %v408 = vsub.f32 2.0, %v406
        %v409 = vsub.f32 2.0, %v407
        %v410 = vmul.f32 %v404, %v408
        %v411 = vmul.f32 %v405, %v409
        %v412 = vmul.f32 %v396, %v410
        %v413 = vmul.f32 %v403, %v411
        %v414 = vsub.f32 2.0, %v412
        %v415 = vsub.f32 2.0, %v413
        %v416 = vmul.f32 %v410, %v414
        %v417 = vmul.f32 %v411, %v415
        %v420 = vrot.slane %v417, 4
        %v421 = vsel %vm361, %v416, %v420
        %v423 = vmul.f32 %v383, %v421
        %v424 = vld [vmem:[%s331] sm:$0xf]
        %v425 = vmul.f32 %v353, %v423
        %427 = vst [vmem:[#allocation1] ss:$2 sm:$0xff] %v425
        %v428 = vld.sshfl [vmem:[#allocation1] sm:$0xff pattern:$0x75316420]
        %v429 = vld.sshfl [vmem:[#allocation1 + $0x8] sm:$0xff pattern:$0x75316420]
        %v432 = vsel %vm361, %v428, 0.0
        %v433 = vsel %vm361, %v429, 0.0
        %v434 = vadd.f32 %v432, %v433
        %435 = vadd.xlane.f32.xlu0 %v434
        %v436 = vpop.xlane.xlu0 %435
        %v437 = vadd.f32 %v424, %v436
        %vm438 = vcmask 3072
        %439 = vst.msk [vmem:[%s331] sm:$0xf] %vm438, %v437
        %v440 = vld [vmem:[%s337] sm:$0xf]
        %442 = vst [vmem:[#allocation1] ss:$2 sm:$0xff] %v353
        %v443 = vld.sshfl [vmem:[#allocation1] sm:$0xff pattern:$0x75316420]
        %v444 = vld.sshfl [vmem:[#allocation1 + $0x8] sm:$0xff pattern:$0x75316420]
        %v447 = vsel %vm361, %v443, 0.0
        %v448 = vsel %vm361, %v444, 0.0
        %v449 = vadd.f32 %v447, %v448
        %450 = vadd.xlane.f32.xlu0 %v449
        %v451 = vpop.xlane.xlu0 %450
        %v452 = vadd.f32 %v440, %v451
        %453 = vst.msk [vmem:[%s337] sm:$0xf] %vm438, %v452
        %v454 = vld [vmem:[%s343] sm:$0xf]
        %456 = vst [vmem:[#allocation1] ss:$2 sm:$0xff] %v423
        %v457 = vld.sshfl [vmem:[#allocation1] sm:$0xff pattern:$0x75316420]
        %v458 = vld.sshfl [vmem:[#allocation1 + $0x8] sm:$0xff pattern:$0x75316420]
        %v461 = vsel %vm361, %v457, 0.0
        %v462 = vsel %vm361, %v458, 0.0
        %v463 = vadd.f32 %v461, %v462
        %464 = vadd.xlane.f32.xlu0 %v463
        %v465 = vpop.xlane.xlu0 %464
        %v466 = vadd.f32 %v454, %v465
        %467 = vst.msk [vmem:[%s343] sm:$0xf] %vm438, %v466
        %s468 = sadd.s32 %s27, %s28
        %p469 = scmp.lt.s32.totalorder %s468, 1
        %s470 = scalar_select %p469, %s468, 1
        %s471 = smul.addr %s470, 4
        %s472 = scalar_lea.vmem %s2, %s471
        %s473 = sadd.s32 %s27, %s28
        %p474 = scmp.lt.s32.totalorder %s473, 1
        %s475 = scalar_select %p474, %s473, 1
        %s476 = smul.addr %s475, 4
        %s477 = scalar_lea.vmem %s3, %s476
        %s478 = sadd.s32 %s27, %s28
        %p479 = scmp.lt.s32.totalorder %s478, 1
        %s480 = scalar_select %p479, %s478, 1
        %s481 = smul.addr %s480, 4
        %s482 = scalar_lea.vmem %s4, %s481
        // Predicated region
        $region41: #{tpu_custom_call.1} parent=27 // pred_check
          %p483 = pneg %p129
        $region42: #{tpu_custom_call.1} parent=27 // pred_check_branch
          %485 = sbr.rel (%p483) target = $region44
        $region43: #{tpu_custom_call.1} parent=27 // pred_region
          %s486 = sadd.s32 %s27, %s28
        $region44: #{tpu_custom_call.1} parent=27 // pred_fallthru
          _
        // Predicated region
        $region45: #{tpu_custom_call.1} parent=27 // pred_check
          %p487 = pneg %p157
        $region46: #{tpu_custom_call.1} parent=27 // pred_check_branch
          %489 = sbr.rel (%p487) target = $region48
        $region47: #{tpu_custom_call.1} parent=27 // pred_region
          %s490 = sadd.s32 %s27, %s28
        $region48: #{tpu_custom_call.1} parent=27 // pred_fallthru
          _
        // Predicated region
        $region49: #{tpu_custom_call.1} parent=27 // pred_check
          %p491 = pneg %p185
        $region50: #{tpu_custom_call.1} parent=27 // pred_check_branch
          %493 = sbr.rel (%p491) target = $region52
        $region51: #{tpu_custom_call.1} parent=27 // pred_region
          %s494 = sadd.s32 %s27, %s28
        $region52: #{tpu_custom_call.1} parent=27 // pred_fallthru
          _
      $region28: #{tpu_custom_call.1} parent=5 // pred_fallthru
        _
      %p495 = scmp.le.s32.totalorder 2, %s17
      // Predicated region
      $region53: #{tpu_custom_call.1} parent=5 // pred_check
        %p496 = pneg %p495
      $region54: #{tpu_custom_call.1} parent=5 // pred_check_branch
        %498 = sbr.rel (%p496) target = $region56
      $region55: #{tpu_custom_call.1} parent=5 // pred_region
        %s499 = ssub.s32 %s17, 2
        // Predicated region
        $region57: #{tpu_custom_call.1} parent=55 // pred_check
          %p500 = pneg %p135
        $region58: #{tpu_custom_call.1} parent=55 // pred_check_branch
          %502 = sbr.rel (%p500) target = $region60
        $region59: #{tpu_custom_call.1} parent=55 // pred_region
          %s503 = sadd.s32 %s30, %s31
          %p504 = scmp.lt.s32.totalorder %s503, 1
          %s505 = scalar_select %p504, %s503, 1
          %s506 = smul.addr %s505, 4
          %s507 = scalar_lea.vmem %s2, %s506
        $region60: #{tpu_custom_call.1} parent=55 // pred_fallthru
          _
        // Predicated region
        $region61: #{tpu_custom_call.1} parent=55 // pred_check
          %p508 = pneg %p163
        $region62: #{tpu_custom_call.1} parent=55 // pred_check_branch
          %510 = sbr.rel (%p508) target = $region64
        $region63: #{tpu_custom_call.1} parent=55 // pred_region
          %s511 = sadd.s32 %s30, %s31
          %p512 = scmp.lt.s32.totalorder %s511, 1
          %s513 = scalar_select %p512, %s511, 1
          %s514 = smul.addr %s513, 4
          %s515 = scalar_lea.vmem %s3, %s514
        $region64: #{tpu_custom_call.1} parent=55 // pred_fallthru
          _
        // Predicated region
        $region65: #{tpu_custom_call.1} parent=55 // pred_check
          %p516 = pneg %p191
        $region66: #{tpu_custom_call.1} parent=55 // pred_check_branch
          %518 = sbr.rel (%p516) target = $region68
        $region67: #{tpu_custom_call.1} parent=55 // pred_region
          %s519 = sadd.s32 %s30, %s31
          %p520 = scmp.lt.s32.totalorder %s519, 1
          %s521 = scalar_select %p520, %s519, 1
          %s522 = smul.addr %s521, 4
          %s523 = scalar_lea.vmem %s4, %s522
        $region68: #{tpu_custom_call.1} parent=55 // pred_fallthru
          _
      $region56: #{tpu_custom_call.1} parent=5 // pred_fallthru
        _
    $region6: #{tpu_custom_call.1} parent=1 // loop_footer
      %s21 = sadd.s32 1, %s17
    $region7: #{tpu_custom_call.1} parent=1 // loop_footer_branch
      %16 = sbr.rel target = $region3
    $region8: #{tpu_custom_call.1} parent=1 // loop_exit
      _
    %524 = vsyncpa [#allocation3], 1
    %s525 = scalar_lea.sflag [#allocation3], 1
    %526 = vsyncpa %s525, 1
    %527 = vsyncpa [#allocation5], 1
    %s528 = scalar_lea.sflag [#allocation5], 1
    %529 = vsyncpa %s528, 1

</llo_original>
